<compile_context>
chip_gen: v7x
topology: tpu7x:2x2x1
jax: 0.10.0
libtpu: 0.0.40
codegen_flags: <defaults>
</compile_context>

<pallas_src>
import jax
import jax.numpy as jnp
from jax import lax
from jax.experimental import pallas as pl
from jax.experimental.pallas import tpu as pltpu
import numpy as np
from math import sqrt


def _sa_membank_kernel(xm_ref, w_ref, o_ref):
    # xm_ref: (B*T, D) token rows, laid out per batch as [x_b (N rows); mem (M rows)]
    # w_ref:  (D, 3D) pre-transposed fused QKV weight
    # o_ref:  (B, T, D) output
    B, T, D = o_ref.shape
    scale = 1.0 / sqrt(float(D))

    # Single fused QKV projection for all batches + memory tokens: one MXU matmul.
    qkv = jnp.dot(xm_ref[...], w_ref[...],
                  preferred_element_type=jnp.float32)          # (B*T, 3D)

    # Hoisted outside the loop (JAX does not CSE broadcasts/constants per-iter).
    ones_row = jnp.ones((1, T), dtype=jnp.float32)

    # B is tiny (2): a statically unrolled loop is cheapest.
    # TODO(synk): if B grows beyond a handful, move this to a grid axis (v7x:
    # dimension_semantics=("parallel",)) or lax.fori_loop(..., unroll=True).
    for b in range(B):
        qkv_b = qkv[b * T:(b + 1) * T, :]                      # contiguous (T, 3D) slice
        q = qkv_b[:, 0 * D:1 * D]                              # (T, D)
        k = qkv_b[:, 1 * D:2 * D]                              # (T, D)
        v = qkv_b[:, 2 * D:3 * D]                              # (T, D)

        # logits[i, j] = k[i] . q[j] / sqrt(D); contract last dims directly
        # (no q.T materialization / XLU transpose).
        logits = lax.dot_general(
            k, q, dimension_numbers=(((1,), (1,)), ((), ())),
            preferred_element_type=jnp.float32) * scale        # (T, T)

        # softmax over PyTorch dim=1 == axis 0 of this (T, T) slab
        mx = jnp.max(logits, axis=0, keepdims=True)            # (1, T)
        e = jnp.exp(logits - mx)                               # (T, T)  (EUP)
        # column sums via a ones-row MXU matmul (keeps the XLU free)
        denom = jnp.dot(ones_row, e,
                        preferred_element_type=jnp.float32)    # (1, T)
        # fast reciprocal on the EUP + one Newton step -> ~1e-7 relative error
        r = pl.reciprocal(denom, approx=True)
        r = r * (2.0 - denom * r)
        p = e * r                                              # (T, T)

        # out[i, :] = sum_j p[i, j] * v[j, :]
        o_ref[b] = jnp.dot(p, v,
                           preferred_element_type=jnp.float32).astype(o_ref.dtype)


def init_sa_membank_params(mem, w_qkv):
    """One-time parameter preprocessing (hoisted out of the per-call path).

    mem:   (1, D, M) memory bank parameter
    w_qkv: (3D, D)   PyTorch Linear weight (y = x @ W^T; chunk(3, dim=-1))
    returns (mem_tokens (M, D), w_fused (D, 3D))
    """
    mem_tokens = jnp.transpose(mem[0], (1, 0))    # (M, D): memory bank as tokens
    w_fused = jnp.transpose(w_qkv, (1, 0))        # (D, 3D): q cols [0:D), k [D:2D), v [2D:3D)
    return mem_tokens, w_fused


def self_attention_memory_bank(x, mem_tokens, w_fused):
    """x: (B, N, D) f32; mem_tokens: (M, D) f32; w_fused: (D, 3D) f32."""
    B, N, D = x.shape
    M = mem_tokens.shape[0]
    T = N + M

    # Stack tokens per batch as [x_b ; mem] so each batch's QKV slab is a contiguous
    # row slice after ONE fused matmul.  Duplicating the M mem rows per batch costs
    # only (B-1)*M*D floats (~2 KiB) of HBM; the concat is negligible at this size.
    mem_rep = jnp.broadcast_to(mem_tokens[None, :, :], (B, M, D))
    xm_rows = jnp.concatenate([x, mem_rep], axis=1).reshape(B * T, D)   # (B*T, D)

    grid_spec = pltpu.PrefetchScalarGridSpec(
        num_scalar_prefetch=0,
        # Single invocation: everything (~40 KiB) fits VMEM; grid splits only add
        # per-step overhead on single-TC chips.  (v7x: grid=(B,) "parallel" would
        # engage both TensorCores -- benchmark if B grows.)
        grid=(1,),
        in_specs=[
            pl.BlockSpec((B * T, D), lambda i: (0, 0)),
            pl.BlockSpec((D, 3 * D), lambda i: (0, 0)),
        ],
        out_specs=pl.BlockSpec((B, T, D), lambda i: (0, 0, 0)),
    )

    return pl.pallas_call(
        _sa_membank_kernel,
        out_shape=jax.ShapeDtypeStruct((B, T, D), x.dtype),
        grid_spec=grid_spec,
        compiler_params=pltpu.CompilerParams(
            dimension_semantics=("arbitrary",)),
    )(xm_rows, w_fused)


def _reference(x, mem, w_qkv):
    """Pure-JAX reference mirroring the PyTorch module line by line."""
    B, N, D = x.shape
    _, _, M = mem.shape
    m = jnp.broadcast_to(mem, (B, D, M))
    m_key = jnp.transpose(m, (0, 2, 1))                           # (B, M, D)
    xm = jnp.concatenate([x, m_key], axis=1)                      # (B, T, D)
    qkv = jnp.einsum("btd,ed->bte", xm, w_qkv)                    # (B, T, 3D)
    q, k, v = jnp.split(qkv, 3, axis=-1)
    logits = jnp.einsum("bid,bjd->bij", k, q) / sqrt(float(D))    # (B, T, T)
    p = jax.nn.softmax(logits, axis=1)                            # softmax over dim=1
    return jnp.einsum("bij,bjd->bid", p, v)


if __name__ == "__main__":
    key = jax.random.PRNGKey(0)
    k_x, k_mem, k_w = jax.random.split(key, 3)

    B, N, D, M = 2, 16, 32, 16   # small shapes consistent with the module

    x = jax.random.normal(k_x, (B, N, D), dtype=jnp.float32)
    mem = jax.random.normal(k_mem, (1, D, M), dtype=jnp.float32)      # nn.Parameter normal_(0,1)
    w_qkv = jax.random.normal(k_w, (3 * D, D), dtype=jnp.float32) * (1.0 / sqrt(D))

    # One-time parameter preprocessing (amortized across calls).
    mem_tokens, w_fused = init_sa_membank_params(mem, w_qkv)
    mem_tokens, w_fused = jax.block_until_ready((mem_tokens, w_fused))

    out = self_attention_memory_bank(x, mem_tokens, w_fused)
    out = jax.block_until_ready(out)

    ref = jax.block_until_ready(_reference(x, mem, w_qkv))
    np.testing.assert_allclose(np.asarray(out), np.asarray(ref), rtol=1e-5, atol=1e-5)

    print("KERNEL_OK")
</pallas_src>

<mosaic_0001>
module attributes {stable_mosaic.version = 11 : i64} {
  func.func @_sa_membank_kernel(%arg0: i32, %arg1: memref<64x32xf32, #tpu.memory_space<vmem>>, %arg2: memref<32x96xf32, #tpu.memory_space<vmem>>, %arg3: memref<2x32x32xf32, #tpu.memory_space<vmem>>) attributes {dimension_semantics = [#tpu.dimension_semantics<arbitrary>], iteration_bounds = array<i64: 1>, scalar_prefetch = 0 : i64, scratch_operands = 0 : i64, tpu.core_type = #tpu.core_type<tc>, window_params = [{pipeline_mode = #tpu.pipeline_mode<synchronous>, transform_indices = @transform_0, window_bounds = array<i64: 64, 32>}, {pipeline_mode = #tpu.pipeline_mode<synchronous>, transform_indices = @transform_1, window_bounds = array<i64: 32, 96>}, {pipeline_mode = #tpu.pipeline_mode<synchronous>, transform_indices = @transform_2, window_bounds = array<i64: 2, 32, 32>}]} {
    %c0 = arith.constant 0 : index
    %c0_0 = arith.constant 0 : index
    %0 = vector.load %arg1[%c0, %c0_0] : memref<64x32xf32, #tpu.memory_space<vmem>>, vector<64x32xf32>
    %c0_1 = arith.constant 0 : index
    %c0_2 = arith.constant 0 : index
    %1 = vector.load %arg2[%c0_1, %c0_2] : memref<32x96xf32, #tpu.memory_space<vmem>>, vector<32x96xf32>
    %cst = arith.constant dense<0.000000e+00> : vector<64x96xf32>
    %2 = tpu.matmul %0, %1, %cst {dimension_numbers = #tpu.dot_dimension_numbers<[1], [0], [0], [1], [0, 0, 1, 1], [], []>} : vector<64x32xf32>, vector<32x96xf32>, vector<64x96xf32> -> vector<64x96xf32>
    %cst_3 = arith.constant 1.000000e+00 : f32
    %3 = vector.broadcast %cst_3 : f32 to vector<1x32xf32>
    %4 = vector.extract_strided_slice %2 {offsets = [0, 0], sizes = [32, 96], strides = [1, 1]} : vector<64x96xf32> to vector<32x96xf32>
    %5 = vector.extract_strided_slice %4 {offsets = [0, 0], sizes = [32, 32], strides = [1, 1]} : vector<32x96xf32> to vector<32x32xf32>
    %6 = vector.extract_strided_slice %4 {offsets = [0, 32], sizes = [32, 32], strides = [1, 1]} : vector<32x96xf32> to vector<32x32xf32>
    %7 = vector.extract_strided_slice %4 {offsets = [0, 64], sizes = [32, 32], strides = [1, 1]} : vector<32x96xf32> to vector<32x32xf32>
    %cst_4 = arith.constant dense<0.000000e+00> : vector<32x32xf32>
    %8 = tpu.matmul %6, %5, %cst_4 {dimension_numbers = #tpu.dot_dimension_numbers<[1], [1], [0], [0], [0, 0, 1, 0], [], []>} : vector<32x32xf32>, vector<32x32xf32>, vector<32x32xf32> -> vector<32x32xf32>
    %cst_5 = arith.constant 0.176776692 : f32
    %9 = vector.broadcast %cst_5 : f32 to vector<32x32xf32>
    %10 = arith.mulf %8, %9 : vector<32x32xf32>
    %cst_6 = arith.constant dense<0xFF800000> : vector<32xf32>
    %11 = vector.multi_reduction <maximumf>, %10, %cst_6 [0] : vector<32x32xf32> to vector<32xf32>
    %12 = vector.shape_cast %11 : vector<32xf32> to vector<1x32xf32>
    %13 = vector.broadcast %12 : vector<1x32xf32> to vector<32x32xf32>
    %14 = arith.subf %10, %13 : vector<32x32xf32>
    %15 = math.exp %14 : vector<32x32xf32>
    %cst_7 = arith.constant dense<0.000000e+00> : vector<1x32xf32>
    %16 = tpu.matmul %3, %15, %cst_7 {dimension_numbers = #tpu.dot_dimension_numbers<[1], [0], [0], [1], [0, 0, 1, 1], [], []>} : vector<1x32xf32>, vector<32x32xf32>, vector<1x32xf32> -> vector<1x32xf32>
    %17 = tpu.reciprocal %16 {approx = true} : vector<1x32xf32> -> vector<1x32xf32>
    %18 = arith.mulf %16, %17 : vector<1x32xf32>
    %cst_8 = arith.constant 2.000000e+00 : f32
    %19 = vector.broadcast %cst_8 : f32 to vector<1x32xf32>
    %20 = arith.subf %19, %18 : vector<1x32xf32>
    %21 = arith.mulf %17, %20 : vector<1x32xf32>
    %22 = vector.broadcast %21 : vector<1x32xf32> to vector<32x32xf32>
    %23 = arith.mulf %15, %22 : vector<32x32xf32>
    %cst_9 = arith.constant dense<0.000000e+00> : vector<32x32xf32>
    %24 = tpu.matmul %23, %7, %cst_9 {dimension_numbers = #tpu.dot_dimension_numbers<[1], [0], [0], [1], [0, 0, 1, 1], [], []>} : vector<32x32xf32>, vector<32x32xf32>, vector<32x32xf32> -> vector<32x32xf32>
    %c0_10 = arith.constant 0 : index
    %c0_11 = arith.constant 0 : index
    %c0_12 = arith.constant 0 : index
    %25 = vector.load %arg3[%c0_10, %c0_11, %c0_12] : memref<2x32x32xf32, #tpu.memory_space<vmem>>, vector<1x32x32xf32>
    %26 = vector.shape_cast %25 : vector<1x32x32xf32> to vector<32x32xf32>
    %27 = vector.shape_cast %24 : vector<32x32xf32> to vector<1x32x32xf32>
    tpu.vector_store %arg3[%c0_10, %c0_11, %c0_12], %27 {strides = array<i32>} : memref<2x32x32xf32, #tpu.memory_space<vmem>>, vector<1x32x32xf32>,
    %28 = vector.extract_strided_slice %2 {offsets = [32, 0], sizes = [32, 96], strides = [1, 1]} : vector<64x96xf32> to vector<32x96xf32>
    %29 = vector.extract_strided_slice %28 {offsets = [0, 0], sizes = [32, 32], strides = [1, 1]} : vector<32x96xf32> to vector<32x32xf32>
    %30 = vector.extract_strided_slice %28 {offsets = [0, 32], sizes = [32, 32], strides = [1, 1]} : vector<32x96xf32> to vector<32x32xf32>
    %31 = vector.extract_strided_slice %28 {offsets = [0, 64], sizes = [32, 32], strides = [1, 1]} : vector<32x96xf32> to vector<32x32xf32>
    %cst_13 = arith.constant dense<0.000000e+00> : vector<32x32xf32>
    %32 = tpu.matmul %30, %29, %cst_13 {dimension_numbers = #tpu.dot_dimension_numbers<[1], [1], [0], [0], [0, 0, 1, 0], [], []>} : vector<32x32xf32>, vector<32x32xf32>, vector<32x32xf32> -> vector<32x32xf32>
    %cst_14 = arith.constant 0.176776692 : f32
    %33 = vector.broadcast %cst_14 : f32 to vector<32x32xf32>
    %34 = arith.mulf %32, %33 : vector<32x32xf32>
    %cst_15 = arith.constant dense<0xFF800000> : vector<32xf32>
    %35 = vector.multi_reduction <maximumf>, %34, %cst_15 [0] : vector<32x32xf32> to vector<32xf32>
    %36 = vector.shape_cast %35 : vector<32xf32> to vector<1x32xf32>
    %37 = vector.broadcast %36 : vector<1x32xf32> to vector<32x32xf32>
    %38 = arith.subf %34, %37 : vector<32x32xf32>
    %39 = math.exp %38 : vector<32x32xf32>
    %cst_16 = arith.constant dense<0.000000e+00> : vector<1x32xf32>
    %40 = tpu.matmul %3, %39, %cst_16 {dimension_numbers = #tpu.dot_dimension_numbers<[1], [0], [0], [1], [0, 0, 1, 1], [], []>} : vector<1x32xf32>, vector<32x32xf32>, vector<1x32xf32> -> vector<1x32xf32>
    %41 = tpu.reciprocal %40 {approx = true} : vector<1x32xf32> -> vector<1x32xf32>
    %42 = arith.mulf %40, %41 : vector<1x32xf32>
    %cst_17 = arith.constant 2.000000e+00 : f32
    %43 = vector.broadcast %cst_17 : f32 to vector<1x32xf32>
    %44 = arith.subf %43, %42 : vector<1x32xf32>
    %45 = arith.mulf %41, %44 : vector<1x32xf32>
    %46 = vector.broadcast %45 : vector<1x32xf32> to vector<32x32xf32>
    %47 = arith.mulf %39, %46 : vector<32x32xf32>
    %cst_18 = arith.constant dense<0.000000e+00> : vector<32x32xf32>
    %48 = tpu.matmul %47, %31, %cst_18 {dimension_numbers = #tpu.dot_dimension_numbers<[1], [0], [0], [1], [0, 0, 1, 1], [], []>} : vector<32x32xf32>, vector<32x32xf32>, vector<32x32xf32> -> vector<32x32xf32>
    %c1 = arith.constant 1 : index
    %c0_19 = arith.constant 0 : index
    %c0_20 = arith.constant 0 : index
    %49 = vector.load %arg3[%c1, %c0_19, %c0_20] : memref<2x32x32xf32, #tpu.memory_space<vmem>>, vector<1x32x32xf32>
    %50 = vector.shape_cast %49 : vector<1x32x32xf32> to vector<32x32xf32>
    %51 = vector.shape_cast %48 : vector<32x32xf32> to vector<1x32x32xf32>
    tpu.vector_store %arg3[%c1, %c0_19, %c0_20], %51 {strides = array<i32>} : memref<2x32x32xf32, #tpu.memory_space<vmem>>, vector<1x32x32xf32>,
    return
  }
  func.func @transform_0(%arg0: i32) -> (i32, i32) {
    %c0_i32 = arith.constant 0 : i32
    %c0_i32_0 = arith.constant 0 : i32
    %c0_i32_1 = arith.constant 0 : i32
    return %c0_i32, %c0_i32_0 : i32, i32
  }
  func.func @transform_1(%arg0: i32) -> (i32, i32) {
    %c0_i32 = arith.constant 0 : i32
    %c0_i32_0 = arith.constant 0 : i32
    %c0_i32_1 = arith.constant 0 : i32
    return %c0_i32, %c0_i32_0 : i32, i32
  }
  func.func @transform_2(%arg0: i32) -> (i32, i32, i32) {
    %c0_i32 = arith.constant 0 : i32
    %c0_i32_0 = arith.constant 0 : i32
    %c0_i32_1 = arith.constant 0 : i32
    %c0_i32_2 = arith.constant 0 : i32
    return %c0_i32, %c0_i32_0, %c0_i32_1 : i32, i32, i32
  }
}

</mosaic_0001>

<llo_original>
// kernel: tpu_custom_call.1
$region0: #{tpu_custom_call.1}
  #allocation0 [shape = 'u32[]', space=smem, size = 0x4, offset = 0x4, fixed_abs, tag = 'smem constant byte address 0x4 - core index']
  #allocation1 [shape = 'u32[144,128]{1,0:T(1,128)}', space=vmem, size = 0x12000, scoped, tag = 'internal scratch']
  %s0 = inlined_call_operand.vmem [shape: f32[64,32], index: 0, kind: input, shape index: {}]
  %s1 = inlined_call_operand.vmem [shape: f32[32,96], index: 1, kind: input, shape index: {}]
  %s2 = inlined_call_operand.hbm [shape: f32[2,32,32], index: 2, kind: output, shape index: {}]
  %s3 = sld [smem:[#allocation0]]
  $region18: #{tpu_custom_call.1} parent=0
    _
  %s5 = ssub.s32 1, %s3
  %s6 = scalar_select 0, %s5, %s3
  $region1: #{tpu_custom_call.1} parent=0
    #allocation2 [shape = 'u8[32768]{0}', space=vmem, size = 0x8000, scoped, tag = 'output window, operand 0, single buffered']
    #allocation3 [shape = 's32[1]{0}', space=sflag, size = 0x4, scoped, tag = 'scoped memory for tpu_custom_call.1']
    %7 = vsyncpa [#allocation3], 0
    // Predicated region
    $region2: #{tpu_custom_call.1} parent=1 // pred_check
      _
    $region3: #{tpu_custom_call.1} parent=1 // pred_check_branch
      %9 = sbr.rel (0) target = $region5
    $region4: #{tpu_custom_call.1} parent=1 // pred_region
      _
    $region5: #{tpu_custom_call.1} parent=1 // pred_fallthru
      _
    // Predicated region
    $region6: #{tpu_custom_call.1} parent=1 // pred_check
      _
    $region7: #{tpu_custom_call.1} parent=1 // pred_check_branch
      %11 = sbr.rel (0) target = $region9
    $region8: #{tpu_custom_call.1} parent=1 // pred_region
      _
    $region9: #{tpu_custom_call.1} parent=1 // pred_fallthru
      _
    %v12 = vld [vmem:[%s0] sm:$0xff]
    %v13 = vld [vmem:[%s0 + $0x8] sm:$0xff]
    %v14 = vld [vmem:[%s0 + $0x10] sm:$0xff]
    %v15 = vld [vmem:[%s0 + $0x18] sm:$0xff]
    %v16 = vld [vmem:[%s0 + $0x20] sm:$0xff]
    %v17 = vld [vmem:[%s0 + $0x28] sm:$0xff]
    %v18 = vld [vmem:[%s0 + $0x30] sm:$0xff]
    %v19 = vld [vmem:[%s0 + $0x38] sm:$0xff]
    %v20 = vld [vmem:[%s1] sm:$0xff]
    %v21 = vld [vmem:[%s1 + $0x8] sm:$0xff]
    %v22 = vld [vmem:[%s1 + $0x10] sm:$0xff]
    %v23 = vld [vmem:[%s1 + $0x18] sm:$0xff]
    %vm24 = vcmask 261120
    %v26 = vsel %vm24, %v12, 0
    %v29 = vsel %vm24, %v13, 0
    %v32 = vsel %vm24, %v14, 0
    %v35 = vsel %vm24, %v15, 0
    %v38 = vsel %vm24, %v16, 0
    %v41 = vsel %vm24, %v17, 0
    %v44 = vsel %vm24, %v18, 0
    %v47 = vsel %vm24, %v19, 0
    %49 = vmatprep.subr.mxu0 0.0
    %50 = vmatpush1.msra.mxu0 %v20
    %51 = vmatprep.subr.mxu0 0.0
    %52 = vmatpush1.msra.mxu0 %v21
    %53 = vmatprep.subr.mxu0 0.0
    %54 = vmatpush1.msra.mxu0 %v22
    %55 = vmatprep.subr.mxu0 0.0
    %56 = vmatpush1.msra.mxu0 %v23
    %57 = vmatprep.subr.mxu0 0.0
    %58 = vmatpush1.msra.mxu0 0.0
    %59 = vmatprep.subr.mxu0 0.0
    %60 = vmatpush1.msra.mxu0 0.0
    %61 = vmatprep.subr.mxu0 0.0
    %62 = vmatpush1.msra.mxu0 0.0
    %63 = vmatprep.subr.mxu0 0.0
    %64 = vmatpush1.msra.mxu0 0.0
    %65 = vmatprep.subr.mxu0 0.0
    %66 = vmatpush1.msra.mxu0 0.0
    %67 = vmatprep.subr.mxu0 0.0
    %68 = vmatpush1.msra.mxu0 0.0
    %69 = vmatprep.subr.mxu0 0.0
    %70 = vmatpush1.msra.mxu0 0.0
    %71 = vmatprep.subr.mxu0 0.0
    %72 = vmatpush1.msra.mxu0 0.0
    %73 = vmatprep.subr.mxu0 0.0
    %74 = vmatpush1.msra.mxu0 0.0
    %75 = vmatprep.subr.mxu0 0.0
    %76 = vmatpush1.msra.mxu0 0.0
    %77 = vmatprep.subr.mxu0 0.0
    %78 = vmatpush1.msra.mxu0 0.0
    %79 = vmatprep.subr.mxu0 0.0
    %80 = vmatpush1.msra.mxu0 0.0
    %81 = vmatprep.subr.mxu0 0.0
    %82 = vmatpush1.msra.mxu0 0.0
    %83 = vmatprep.subr.mxu0 0.0
    %84 = vmatpush1.msra.mxu0 0.0
    %85 = vmatprep.subr.mxu0 0.0
    %86 = vmatpush1.msra.mxu0 0.0
    %87 = vmatprep.subr.mxu0 0.0
    %88 = vmatpush1.msra.mxu0 0.0
    %89 = vmatprep.subr.mxu0 0.0
    %90 = vmatpush1.msra.mxu0 0.0
    %91 = vmatprep.subr.mxu0 0.0
    %92 = vmatpush1.msra.mxu0 0.0
    %93 = vmatprep.subr.mxu0 0.0
    %94 = vmatpush1.msra.mxu0 0.0
    %95 = vmatprep.subr.mxu0 0.0
    %96 = vmatpush1.msra.mxu0 0.0
    %97 = vmatprep.subr.mxu0 0.0
    %98 = vmatpush1.msra.mxu0 0.0
    %99 = vmatprep.subr.mxu0 0.0
    %100 = vmatpush1.msra.mxu0 0.0
    %101 = vmatprep.subr.mxu0 0.0
    %102 = vmatpush1.msra.mxu0 0.0
    %103 = vmatprep.subr.mxu0 0.0
    %104 = vmatpush1.msra.mxu0 0.0
    %105 = vmatprep.subr.mxu0 0.0
    %106 = vmatpush1.msra.mxu0 0.0
    %107 = vmatprep.subr.mxu0 0.0
    %108 = vmatpush1.msra.mxu0 0.0
    %109 = vmatprep.subr.mxu0 0.0
    %110 = vmatpush1.msra.mxu0 0.0
    %111 = vmatprep.subr.mxu0 0.0
    %112 = vmatpush1.msra.mxu0 0.0
    %113 = vmatprep.mubr.f32.mxu0 0.0
    %114 = vmatmul.mubr.f32.gmra.mrb[0].mxu0 %v26
    %v115 = vpop.f32.mrb[0].mxu0
    %v116 = vadd.f32 0.0, %v115
    %v117 = vpop.f32.mrb[0].mxu0
    %118 = vmatprep.mubr.f32.mxu0 0.0
    %119 = vmatmul.mubr.f32.gmra.mrb[0].mxu0 %v29
    %v120 = vpop.f32.mrb[0].mxu0
    %v121 = vadd.f32 0.0, %v120
    %v122 = vpop.f32.mrb[0].mxu0
    %123 = vmatprep.mubr.f32.mxu0 0.0
    %124 = vmatmul.mubr.f32.gmra.mrb[0].mxu0 %v32
    %v125 = vpop.f32.mrb[0].mxu0
    %v126 = vadd.f32 0.0, %v125
    %v127 = vpop.f32.mrb[0].mxu0
    %128 = vmatprep.mubr.f32.mxu0 0.0
    %129 = vmatmul.mubr.f32.gmra.mrb[0].mxu0 %v35
    %v130 = vpop.f32.mrb[0].mxu0
    %v131 = vadd.f32 0.0, %v130
    %v132 = vpop.f32.mrb[0].mxu0
    %133 = vmatprep.mubr.f32.mxu0 0.0
    %134 = vmatmul.mubr.f32.gmra.mrb[0].mxu0 %v38
    %v135 = vpop.f32.mrb[0].mxu0
    %v136 = vadd.f32 0.0, %v135
    %v137 = vpop.f32.mrb[0].mxu0
    %138 = vmatprep.mubr.f32.mxu0 0.0
    %139 = vmatmul.mubr.f32.gmra.mrb[0].mxu0 %v41
    %v140 = vpop.f32.mrb[0].mxu0
    %v141 = vadd.f32 0.0, %v140
    %v142 = vpop.f32.mrb[0].mxu0
    %143 = vmatprep.mubr.f32.mxu0 0.0
    %144 = vmatmul.mubr.f32.gmra.mrb[0].mxu0 %v44
    %v145 = vpop.f32.mrb[0].mxu0
    %v146 = vadd.f32 0.0, %v145
    %v147 = vpop.f32.mrb[0].mxu0
    %148 = vmatprep.mubr.f32.mxu0 0.0
    %149 = vmatmul.mubr.f32.gmra.mrb[0].mxu0 %v47
    %v150 = vpop.f32.mrb[0].mxu0
    %v151 = vadd.f32 0.0, %v150
    %v152 = vpop.f32.mrb[0].mxu0
    %153 = vdwg.mxu0
    %158 = vrot.lane.b32.xlu0 %v116, 96
    %v159 = vpop.permute.xlu0 %158
    %160 = vrot.lane.b32.xlu0 %v121, 96
    %v161 = vpop.permute.xlu0 %160
    %162 = vrot.lane.b32.xlu0 %v126, 96
    %v163 = vpop.permute.xlu0 %162
    %164 = vrot.lane.b32.xlu0 %v131, 96
    %v165 = vpop.permute.xlu0 %164
    %v166 = vsel %vm24, %v159, 0
    %v168 = vsel %vm24, %v161, 0
    %v170 = vsel %vm24, %v163, 0
    %v172 = vsel %vm24, %v165, 0
    %v174 = vsel %vm24, %v116, 0
    %v176 = vsel %vm24, %v121, 0
    %v178 = vsel %vm24, %v126, 0
    %v180 = vsel %vm24, %v131, 0
    %182 = vmatprep.subr.mxu0 0.0
    %183 = vmatpush1.xpose.msra.mxu0 %v174
    %184 = vmatprep.subr.mxu0 0.0
    %185 = vmatpush1.xpose.msra.mxu0 %v176
    %186 = vmatprep.subr.mxu0 0.0
    %187 = vmatpush1.xpose.msra.mxu0 %v178
    %188 = vmatprep.subr.mxu0 0.0
    %189 = vmatpush1.xpose.msra.mxu0 %v180
    %190 = vmatprep.subr.mxu0 0.0
    %191 = vmatpush1.xpose.msra.mxu0 0.0
    %192 = vmatprep.subr.mxu0 0.0
    %193 = vmatpush1.xpose.msra.mxu0 0.0
    %194 = vmatprep.subr.mxu0 0.0
    %195 = vmatpush1.xpose.msra.mxu0 0.0
    %196 = vmatprep.subr.mxu0 0.0
    %197 = vmatpush1.xpose.msra.mxu0 0.0
    %198 = vmatprep.subr.mxu0 0.0
    %199 = vmatpush1.xpose.msra.mxu0 0.0
    %200 = vmatprep.subr.mxu0 0.0
    %201 = vmatpush1.xpose.msra.mxu0 0.0
    %202 = vmatprep.subr.mxu0 0.0
    %203 = vmatpush1.xpose.msra.mxu0 0.0
    %204 = vmatprep.subr.mxu0 0.0
    %205 = vmatpush1.xpose.msra.mxu0 0.0
    %206 = vmatprep.subr.mxu0 0.0
    %207 = vmatpush1.xpose.msra.mxu0 0.0
    %208 = vmatprep.subr.mxu0 0.0
    %209 = vmatpush1.xpose.msra.mxu0 0.0
    %210 = vmatprep.subr.mxu0 0.0
    %211 = vmatpush1.xpose.msra.mxu0 0.0
    %212 = vmatprep.subr.mxu0 0.0
    %213 = vmatpush1.xpose.msra.mxu0 0.0
    %214 = vmatprep.subr.mxu0 0.0
    %215 = vmatpush1.xpose.msra.mxu0 0.0
    %216 = vmatprep.subr.mxu0 0.0
    %217 = vmatpush1.xpose.msra.mxu0 0.0
    %218 = vmatprep.subr.mxu0 0.0
    %219 = vmatpush1.xpose.msra.mxu0 0.0
    %220 = vmatprep.subr.mxu0 0.0
    %221 = vmatpush1.xpose.msra.mxu0 0.0
    %222 = vmatprep.subr.mxu0 0.0
    %223 = vmatpush1.xpose.msra.mxu0 0.0
    %224 = vmatprep.subr.mxu0 0.0
    %225 = vmatpush1.xpose.msra.mxu0 0.0
    %226 = vmatprep.subr.mxu0 0.0
    %227 = vmatpush1.xpose.msra.mxu0 0.0
    %228 = vmatprep.subr.mxu0 0.0
    %229 = vmatpush1.xpose.msra.mxu0 0.0
    %230 = vmatprep.subr.mxu0 0.0
    %231 = vmatpush1.xpose.msra.mxu0 0.0
    %232 = vmatprep.subr.mxu0 0.0
    %233 = vmatpush1.xpose.msra.mxu0 0.0
    %234 = vmatprep.subr.mxu0 0.0
    %235 = vmatpush1.xpose.msra.mxu0 0.0
    %236 = vmatprep.subr.mxu0 0.0
    %237 = vmatpush1.xpose.msra.mxu0 0.0
    %238 = vmatprep.subr.mxu0 0.0
    %239 = vmatpush1.xpose.msra.mxu0 0.0
    %240 = vmatprep.subr.mxu0 0.0
    %241 = vmatpush1.xpose.msra.mxu0 0.0
    %242 = vmatprep.subr.mxu0 0.0
    %243 = vmatpush1.xpose.msra.mxu0 0.0
    %244 = vmatprep.subr.mxu0 0.0
    %245 = vmatpush1.xpose.msra.mxu0 0.0
    %246 = vmatprep.mubr.f32.mxu0 0.0
    %247 = vmatmul.mubr.f32.gmra.mrb[0].mxu0 %v166
    %v248 = vpop.f32.mrb[0].mxu0
    %v249 = vadd.f32 0.0, %v248
    %v250 = vpop.f32.mrb[0].mxu0
    %251 = vmatprep.mubr.f32.mxu0 0.0
    %252 = vmatmul.mubr.f32.gmra.mrb[0].mxu0 %v168
    %v253 = vpop.f32.mrb[0].mxu0
    %v254 = vadd.f32 0.0, %v253
    %v255 = vpop.f32.mrb[0].mxu0
    %256 = vmatprep.mubr.f32.mxu0 0.0
    %257 = vmatmul.mubr.f32.gmra.mrb[0].mxu0 %v170
    %v258 = vpop.f32.mrb[0].mxu0
    %v259 = vadd.f32 0.0, %v258
    %v260 = vpop.f32.mrb[0].mxu0
    %261 = vmatprep.mubr.f32.mxu0 0.0
    %262 = vmatmul.mubr.f32.gmra.mrb[0].mxu0 %v172
    %v263 = vpop.f32.mrb[0].mxu0
    %v264 = vadd.f32 0.0, %v263
    %v265 = vpop.f32.mrb[0].mxu0
    %266 = vdwg.mxu0
    %v267 = vmul.f32 %v249, 0.17677669
    %v268 = vmul.f32 %v254, 0.17677669
    %v269 = vmul.f32 %v259, 0.17677669
    %v270 = vmul.f32 %v264, 0.17677669
    %v271 = vsel %vm24, %v267, -inf
    %v272 = vsel %vm24, %v268, -inf
    %v273 = vsel %vm24, %v269, -inf
    %v274 = vsel %vm24, %v270, -inf
    %v275 = vmax.f32 %v271, %v272
    %v276 = vmax.f32 %v273, %v274
    %v277 = vmax.f32 %v275, %v276
    %v278 = vrot.slane %v277, 4
    %v279 = vmax.f32 %v277, %v278
    %v280 = vrot.slane %v279, 2
    %v281 = vmax.f32 %v279, %v280
    %v282 = vrot.slane %v281, 1
    %v283 = vmax.f32 %v281, %v282
    %v284 = vsub.f32 %v267, %v283
    %v285 = vsub.f32 %v268, %v283
    %v286 = vsub.f32 %v269, %v283
    %v287 = vsub.f32 %v270, %v283
    %v288 = vmul.f32 %v284, 1.442695
    %v289 = vpow.pop %v288
    %v290 = vmul.f32 %v285, 1.442695
    %v291 = vpow.pop %v290
    %v292 = vmul.f32 %v286, 1.442695
    %v293 = vpow.pop %v292
    %v294 = vmul.f32 %v287, 1.442695
    %v295 = vpow.pop %v294
    %v297 = vsel %vm24, 1.0, 0
    %299 = vmatprep.subr.mxu0 0.0
    %300 = vmatpush1.msra.mxu0 %v289
    %301 = vmatprep.subr.mxu0 0.0
    %302 = vmatpush1.msra.mxu0 %v291
    %303 = vmatprep.subr.mxu0 0.0
    %304 = vmatpush1.msra.mxu0 %v293
    %305 = vmatprep.subr.mxu0 0.0
    %306 = vmatpush1.msra.mxu0 %v295
    %307 = vmatprep.subr.mxu0 0.0
    %308 = vmatpush1.msra.mxu0 0.0
    %309 = vmatprep.subr.mxu0 0.0
    %310 = vmatpush1.msra.mxu0 0.0
    %311 = vmatprep.subr.mxu0 0.0
    %312 = vmatpush1.msra.mxu0 0.0
    %313 = vmatprep.subr.mxu0 0.0
    %314 = vmatpush1.msra.mxu0 0.0
    %315 = vmatprep.subr.mxu0 0.0
    %316 = vmatpush1.msra.mxu0 0.0
    %317 = vmatprep.subr.mxu0 0.0
    %318 = vmatpush1.msra.mxu0 0.0
    %319 = vmatprep.subr.mxu0 0.0
    %320 = vmatpush1.msra.mxu0 0.0
    %321 = vmatprep.subr.mxu0 0.0
    %322 = vmatpush1.msra.mxu0 0.0
    %323 = vmatprep.subr.mxu0 0.0
    %324 = vmatpush1.msra.mxu0 0.0
    %325 = vmatprep.subr.mxu0 0.0
    %326 = vmatpush1.msra.mxu0 0.0
    %327 = vmatprep.subr.mxu0 0.0
    %328 = vmatpush1.msra.mxu0 0.0
    %329 = vmatprep.subr.mxu0 0.0
    %330 = vmatpush1.msra.mxu0 0.0
    %331 = vmatprep.subr.mxu0 0.0
    %332 = vmatpush1.msra.mxu0 0.0
    %333 = vmatprep.subr.mxu0 0.0
    %334 = vmatpush1.msra.mxu0 0.0
    %335 = vmatprep.subr.mxu0 0.0
    %336 = vmatpush1.msra.mxu0 0.0
    %337 = vmatprep.subr.mxu0 0.0
    %338 = vmatpush1.msra.mxu0 0.0
    %339 = vmatprep.subr.mxu0 0.0
    %340 = vmatpush1.msra.mxu0 0.0
    %341 = vmatprep.subr.mxu0 0.0
    %342 = vmatpush1.msra.mxu0 0.0
    %343 = vmatprep.subr.mxu0 0.0
    %344 = vmatpush1.msra.mxu0 0.0
    %345 = vmatprep.subr.mxu0 0.0
    %346 = vmatpush1.msra.mxu0 0.0
    %347 = vmatprep.subr.mxu0 0.0
    %348 = vmatpush1.msra.mxu0 0.0
    %349 = vmatprep.subr.mxu0 0.0
    %350 = vmatpush1.msra.mxu0 0.0
    %351 = vmatprep.subr.mxu0 0.0
    %352 = vmatpush1.msra.mxu0 0.0
    %353 = vmatprep.subr.mxu0 0.0
    %354 = vmatpush1.msra.mxu0 0.0
    %355 = vmatprep.subr.mxu0 0.0
    %356 = vmatpush1.msra.mxu0 0.0
    %357 = vmatprep.subr.mxu0 0.0
    %358 = vmatpush1.msra.mxu0 0.0
    %359 = vmatprep.subr.mxu0 0.0
    %360 = vmatpush1.msra.mxu0 0.0
    %361 = vmatprep.subr.mxu0 0.0
    %362 = vmatpush1.msra.mxu0 0.0
    %363 = vmatprep.mubr.f32.mxu0 0.0
    %364 = vmatmul.mubr.f32.gmra.mrb[0].mxu0 %v297
    %v365 = vpop.f32.mrb[0].mxu0
    %v366 = vadd.f32 0.0, %v365
    %v367 = vpop.f32.mrb[0].mxu0
    %368 = vdwg.mxu0
    %v369 = vrcp.pop %v366
    %v370 = vmul.f32 %v366, %v369
    %v371 = vsub.f32 2.0, %v370
    %v372 = vmul.f32 %v369, %v371
    %v373 = vlaneseq
    %v374 = vshrl.u32 %v373, 7
    %v375 = vsub.s32 0, %v374
    %v376 = vrot.slane %v372, %v375
    %v377 = vmul.f32 %v289, %v376
    %v378 = vmul.f32 %v291, %v376
    %v379 = vmul.f32 %v293, %v376
    %v380 = vmul.f32 %v295, %v376
    %381 = vrot.lane.b32.xlu0 %v116, 64
    %v382 = vpop.permute.xlu0 %381
    %383 = vrot.lane.b32.xlu0 %v121, 64
    %v384 = vpop.permute.xlu0 %383
    %385 = vrot.lane.b32.xlu0 %v126, 64
    %v386 = vpop.permute.xlu0 %385
    %387 = vrot.lane.b32.xlu0 %v131, 64
    %v388 = vpop.permute.xlu0 %387
    %v394 = vsel %vm24, %v377, 0
    %v397 = vsel %vm24, %v378, 0
    %v400 = vsel %vm24, %v379, 0
    %v403 = vsel %vm24, %v380, 0
    %405 = vmatprep.subr.mxu0 0.0
    %406 = vmatpush1.msra.mxu0 %v382
    %407 = vmatprep.subr.mxu0 0.0
    %408 = vmatpush1.msra.mxu0 %v384
    %409 = vmatprep.subr.mxu0 0.0
    %410 = vmatpush1.msra.mxu0 %v386
    %411 = vmatprep.subr.mxu0 0.0
    %412 = vmatpush1.msra.mxu0 %v388
    %413 = vmatprep.subr.mxu0 0.0
    %414 = vmatpush1.msra.mxu0 0.0
    %415 = vmatprep.subr.mxu0 0.0
    %416 = vmatpush1.msra.mxu0 0.0
    %417 = vmatprep.subr.mxu0 0.0
    %418 = vmatpush1.msra.mxu0 0.0
    %419 = vmatprep.subr.mxu0 0.0
    %420 = vmatpush1.msra.mxu0 0.0
    %421 = vmatprep.subr.mxu0 0.0
    %422 = vmatpush1.msra.mxu0 0.0
    %423 = vmatprep.subr.mxu0 0.0
    %424 = vmatpush1.msra.mxu0 0.0
    %425 = vmatprep.subr.mxu0 0.0
    %426 = vmatpush1.msra.mxu0 0.0
    %427 = vmatprep.subr.mxu0 0.0
    %428 = vmatpush1.msra.mxu0 0.0
    %429 = vmatprep.subr.mxu0 0.0
    %430 = vmatpush1.msra.mxu0 0.0
    %431 = vmatprep.subr.mxu0 0.0
    %432 = vmatpush1.msra.mxu0 0.0
    %433 = vmatprep.subr.mxu0 0.0
    %434 = vmatpush1.msra.mxu0 0.0
    %435 = vmatprep.subr.mxu0 0.0
    %436 = vmatpush1.msra.mxu0 0.0
    %437 = vmatprep.subr.mxu0 0.0
    %438 = vmatpush1.msra.mxu0 0.0
    %439 = vmatprep.subr.mxu0 0.0
    %440 = vmatpush1.msra.mxu0 0.0
    %441 = vmatprep.subr.mxu0 0.0
    %442 = vmatpush1.msra.mxu0 0.0
    %443 = vmatprep.subr.mxu0 0.0
    %444 = vmatpush1.msra.mxu0 0.0
    %445 = vmatprep.subr.mxu0 0.0
    %446 = vmatpush1.msra.mxu0 0.0
    %447 = vmatprep.subr.mxu0 0.0
    %448 = vmatpush1.msra.mxu0 0.0
    %449 = vmatprep.subr.mxu0 0.0
    %450 = vmatpush1.msra.mxu0 0.0
    %451 = vmatprep.subr.mxu0 0.0
    %452 = vmatpush1.msra.mxu0 0.0
    %453 = vmatprep.subr.mxu0 0.0
    %454 = vmatpush1.msra.mxu0 0.0
    %455 = vmatprep.subr.mxu0 0.0
    %456 = vmatpush1.msra.mxu0 0.0
    %457 = vmatprep.subr.mxu0 0.0
    %458 = vmatpush1.msra.mxu0 0.0
    %459 = vmatprep.subr.mxu0 0.0
    %460 = vmatpush1.msra.mxu0 0.0
    %461 = vmatprep.subr.mxu0 0.0
    %462 = vmatpush1.msra.mxu0 0.0
    %463 = vmatprep.subr.mxu0 0.0
    %464 = vmatpush1.msra.mxu0 0.0
    %465 = vmatprep.subr.mxu0 0.0
    %466 = vmatpush1.msra.mxu0 0.0
    %467 = vmatprep.subr.mxu0 0.0
    %468 = vmatpush1.msra.mxu0 0.0
    %469 = vmatprep.mubr.f32.mxu0 0.0
    %470 = vmatmul.mubr.f32.gmra.mrb[0].mxu0 %v394
    %v471 = vpop.f32.mrb[0].mxu0
    %v472 = vadd.f32 0.0, %v471
    %v473 = vpop.f32.mrb[0].mxu0
    %474 = vmatprep.mubr.f32.mxu0 0.0
    %475 = vmatmul.mubr.f32.gmra.mrb[0].mxu0 %v397
    %v476 = vpop.f32.mrb[0].mxu0
    %v477 = vadd.f32 0.0, %v476
    %v478 = vpop.f32.mrb[0].mxu0
    %479 = vmatprep.mubr.f32.mxu0 0.0
    %480 = vmatmul.mubr.f32.gmra.mrb[0].mxu0 %v400
    %v481 = vpop.f32.mrb[0].mxu0
    %v482 = vadd.f32 0.0, %v481
    %v483 = vpop.f32.mrb[0].mxu0
    %484 = vmatprep.mubr.f32.mxu0 0.0
    %485 = vmatmul.mubr.f32.gmra.mrb[0].mxu0 %v403
    %v486 = vpop.f32.mrb[0].mxu0
    %v487 = vadd.f32 0.0, %v486
    %v488 = vpop.f32.mrb[0].mxu0
    %489 = vdwg.mxu0
    %490 = vst.msk [vmem:[#allocation2] sm:$0xff] %vm24, %v472
    %491 = vst.msk [vmem:[#allocation2 + $0x8] sm:$0xff] %vm24, %v477
    %492 = vst.msk [vmem:[#allocation2 + $0x10] sm:$0xff] %vm24, %v482
    %493 = vst.msk [vmem:[#allocation2 + $0x18] sm:$0xff] %vm24, %v487
    %498 = vrot.lane.b32.xlu0 %v136, 96
    %v499 = vpop.permute.xlu0 %498
    %500 = vrot.lane.b32.xlu0 %v141, 96
    %v501 = vpop.permute.xlu0 %500
    %502 = vrot.lane.b32.xlu0 %v146, 96
    %v503 = vpop.permute.xlu0 %502
    %504 = vrot.lane.b32.xlu0 %v151, 96
    %v505 = vpop.permute.xlu0 %504
    %v506 = vsel %vm24, %v499, 0
    %v508 = vsel %vm24, %v501, 0
    %v510 = vsel %vm24, %v503, 0
    %v512 = vsel %vm24, %v505, 0
    %v514 = vsel %vm24, %v136, 0
    %v516 = vsel %vm24, %v141, 0
    %v518 = vsel %vm24, %v146, 0
    %v520 = vsel %vm24, %v151, 0
    %522 = vmatprep.subr.mxu0 0.0
    %523 = vmatpush1.xpose.msra.mxu0 %v514
    %524 = vmatprep.subr.mxu0 0.0
    %525 = vmatpush1.xpose.msra.mxu0 %v516
    %526 = vmatprep.subr.mxu0 0.0
    %527 = vmatpush1.xpose.msra.mxu0 %v518
    %528 = vmatprep.subr.mxu0 0.0
    %529 = vmatpush1.xpose.msra.mxu0 %v520
    %530 = vmatprep.subr.mxu0 0.0
    %531 = vmatpush1.xpose.msra.mxu0 0.0
    %532 = vmatprep.subr.mxu0 0.0
    %533 = vmatpush1.xpose.msra.mxu0 0.0
    %534 = vmatprep.subr.mxu0 0.0
    %535 = vmatpush1.xpose.msra.mxu0 0.0
    %536 = vmatprep.subr.mxu0 0.0
    %537 = vmatpush1.xpose.msra.mxu0 0.0
    %538 = vmatprep.subr.mxu0 0.0
    %539 = vmatpush1.xpose.msra.mxu0 0.0
    %540 = vmatprep.subr.mxu0 0.0
    %541 = vmatpush1.xpose.msra.mxu0 0.0
    %542 = vmatprep.subr.mxu0 0.0
    %543 = vmatpush1.xpose.msra.mxu0 0.0
    %544 = vmatprep.subr.mxu0 0.0
    %545 = vmatpush1.xpose.msra.mxu0 0.0
    %546 = vmatprep.subr.mxu0 0.0
    %547 = vmatpush1.xpose.msra.mxu0 0.0
    %548 = vmatprep.subr.mxu0 0.0
    %549 = vmatpush1.xpose.msra.mxu0 0.0
    %550 = vmatprep.subr.mxu0 0.0
    %551 = vmatpush1.xpose.msra.mxu0 0.0
    %552 = vmatprep.subr.mxu0 0.0
    %553 = vmatpush1.xpose.msra.mxu0 0.0
    %554 = vmatprep.subr.mxu0 0.0
    %555 = vmatpush1.xpose.msra.mxu0 0.0
    %556 = vmatprep.subr.mxu0 0.0
    %557 = vmatpush1.xpose.msra.mxu0 0.0
    %558 = vmatprep.subr.mxu0 0.0
    %559 = vmatpush1.xpose.msra.mxu0 0.0
    %560 = vmatprep.subr.mxu0 0.0
    %561 = vmatpush1.xpose.msra.mxu0 0.0
    %562 = vmatprep.subr.mxu0 0.0
    %563 = vmatpush1.xpose.msra.mxu0 0.0
    %564 = vmatprep.subr.mxu0 0.0
    %565 = vmatpush1.xpose.msra.mxu0 0.0
    %566 = vmatprep.subr.mxu0 0.0
    %567 = vmatpush1.xpose.msra.mxu0 0.0
    %568 = vmatprep.subr.mxu0 0.0
    %569 = vmatpush1.xpose.msra.mxu0 0.0
    %570 = vmatprep.subr.mxu0 0.0
    %571 = vmatpush1.xpose.msra.mxu0 0.0
    %572 = vmatprep.subr.mxu0 0.0
    %573 = vmatpush1.xpose.msra.mxu0 0.0
    %574 = vmatprep.subr.mxu0 0.0
    %575 = vmatpush1.xpose.msra.mxu0 0.0
    %576 = vmatprep.subr.mxu0 0.0
    %577 = vmatpush1.xpose.msra.mxu0 0.0
    %578 = vmatprep.subr.mxu0 0.0
    %579 = vmatpush1.xpose.msra.mxu0 0.0
    %580 = vmatprep.subr.mxu0 0.0
    %581 = vmatpush1.xpose.msra.mxu0 0.0
    %582 = vmatprep.subr.mxu0 0.0
    %583 = vmatpush1.xpose.msra.mxu0 0.0
    %584 = vmatprep.subr.mxu0 0.0
    %585 = vmatpush1.xpose.msra.mxu0 0.0
    %586 = vmatprep.mubr.f32.mxu0 0.0
    %587 = vmatmul.mubr.f32.gmra.mrb[0].mxu0 %v506
    %v588 = vpop.f32.mrb[0].mxu0
    %v589 = vadd.f32 0.0, %v588
    %v590 = vpop.f32.mrb[0].mxu0
    %591 = vmatprep.mubr.f32.mxu0 0.0
    %592 = vmatmul.mubr.f32.gmra.mrb[0].mxu0 %v508
    %v593 = vpop.f32.mrb[0].mxu0
    %v594 = vadd.f32 0.0, %v593
    %v595 = vpop.f32.mrb[0].mxu0
    %596 = vmatprep.mubr.f32.mxu0 0.0
    %597 = vmatmul.mubr.f32.gmra.mrb[0].mxu0 %v510
    %v598 = vpop.f32.mrb[0].mxu0
    %v599 = vadd.f32 0.0, %v598
    %v600 = vpop.f32.mrb[0].mxu0
    %601 = vmatprep.mubr.f32.mxu0 0.0
    %602 = vmatmul.mubr.f32.gmra.mrb[0].mxu0 %v512
    %v603 = vpop.f32.mrb[0].mxu0
    %v604 = vadd.f32 0.0, %v603
    %v605 = vpop.f32.mrb[0].mxu0
    %606 = vdwg.mxu0
    %v607 = vmul.f32 %v589, 0.17677669
    %v608 = vmul.f32 %v594, 0.17677669
    %v609 = vmul.f32 %v599, 0.17677669
    %v610 = vmul.f32 %v604, 0.17677669
    %v611 = vsel %vm24, %v607, -inf
    %v612 = vsel %vm24, %v608, -inf
    %v613 = vsel %vm24, %v609, -inf
    %v614 = vsel %vm24, %v610, -inf
    %v615 = vmax.f32 %v611, %v612
    %v616 = vmax.f32 %v613, %v614
    %v617 = vmax.f32 %v615, %v616
    %v618 = vrot.slane %v617, 4
    %v619 = vmax.f32 %v617, %v618
    %v620 = vrot.slane %v619, 2
    %v621 = vmax.f32 %v619, %v620
    %v622 = vrot.slane %v621, 1
    %v623 = vmax.f32 %v621, %v622
    %v624 = vsub.f32 %v607, %v623
    %v625 = vsub.f32 %v608, %v623
    %v626 = vsub.f32 %v609, %v623
    %v627 = vsub.f32 %v610, %v623
    %v628 = vmul.f32 %v624, 1.442695
    %v629 = vpow.pop %v628
    %v630 = vmul.f32 %v625, 1.442695
    %v631 = vpow.pop %v630
    %v632 = vmul.f32 %v626, 1.442695
    %v633 = vpow.pop %v632
    %v634 = vmul.f32 %v627, 1.442695
    %v635 = vpow.pop %v634
    %636 = vmatprep.subr.mxu0 0.0
    %637 = vmatpush1.msra.mxu0 %v629
    %638 = vmatprep.subr.mxu0 0.0
    %639 = vmatpush1.msra.mxu0 %v631
    %640 = vmatprep.subr.mxu0 0.0
    %641 = vmatpush1.msra.mxu0 %v633
    %642 = vmatprep.subr.mxu0 0.0
    %643 = vmatpush1.msra.mxu0 %v635
    %644 = vmatprep.subr.mxu0 0.0
    %645 = vmatpush1.msra.mxu0 0.0
    %646 = vmatprep.subr.mxu0 0.0
    %647 = vmatpush1.msra.mxu0 0.0
    %648 = vmatprep.subr.mxu0 0.0
    %649 = vmatpush1.msra.mxu0 0.0
    %650 = vmatprep.subr.mxu0 0.0
    %651 = vmatpush1.msra.mxu0 0.0
    %652 = vmatprep.subr.mxu0 0.0
    %653 = vmatpush1.msra.mxu0 0.0
    %654 = vmatprep.subr.mxu0 0.0
    %655 = vmatpush1.msra.mxu0 0.0
    %656 = vmatprep.subr.mxu0 0.0
    %657 = vmatpush1.msra.mxu0 0.0
    %658 = vmatprep.subr.mxu0 0.0
    %659 = vmatpush1.msra.mxu0 0.0
    %660 = vmatprep.subr.mxu0 0.0
    %661 = vmatpush1.msra.mxu0 0.0
    %662 = vmatprep.subr.mxu0 0.0
    %663 = vmatpush1.msra.mxu0 0.0
    %664 = vmatprep.subr.mxu0 0.0
    %665 = vmatpush1.msra.mxu0 0.0
    %666 = vmatprep.subr.mxu0 0.0
    %667 = vmatpush1.msra.mxu0 0.0
    %668 = vmatprep.subr.mxu0 0.0
    %669 = vmatpush1.msra.mxu0 0.0
    %670 = vmatprep.subr.mxu0 0.0
    %671 = vmatpush1.msra.mxu0 0.0
    %672 = vmatprep.subr.mxu0 0.0
    %673 = vmatpush1.msra.mxu0 0.0
    %674 = vmatprep.subr.mxu0 0.0
    %675 = vmatpush1.msra.mxu0 0.0
    %676 = vmatprep.subr.mxu0 0.0
    %677 = vmatpush1.msra.mxu0 0.0
    %678 = vmatprep.subr.mxu0 0.0
    %679 = vmatpush1.msra.mxu0 0.0
    %680 = vmatprep.subr.mxu0 0.0
    %681 = vmatpush1.msra.mxu0 0.0
    %682 = vmatprep.subr.mxu0 0.0
    %683 = vmatpush1.msra.mxu0 0.0
    %684 = vmatprep.subr.mxu0 0.0
    %685 = vmatpush1.msra.mxu0 0.0
    %686 = vmatprep.subr.mxu0 0.0
    %687 = vmatpush1.msra.mxu0 0.0
    %688 = vmatprep.subr.mxu0 0.0
    %689 = vmatpush1.msra.mxu0 0.0
    %690 = vmatprep.subr.mxu0 0.0
    %691 = vmatpush1.msra.mxu0 0.0
    %692 = vmatprep.subr.mxu0 0.0
    %693 = vmatpush1.msra.mxu0 0.0
    %694 = vmatprep.subr.mxu0 0.0
    %695 = vmatpush1.msra.mxu0 0.0
    %696 = vmatprep.subr.mxu0 0.0
    %697 = vmatpush1.msra.mxu0 0.0
    %698 = vmatprep.subr.mxu0 0.0
    %699 = vmatpush1.msra.mxu0 0.0
    %700 = vmatprep.mubr.f32.mxu0 0.0
    %701 = vmatmul.mubr.f32.gmra.mrb[0].mxu0 %v297
    %v702 = vpop.f32.mrb[0].mxu0
    %v703 = vadd.f32 0.0, %v702
    %v704 = vpop.f32.mrb[0].mxu0
    %705 = vdwg.mxu0
    %v706 = vrcp.pop %v703
    %v707 = vmul.f32 %v703, %v706
    %v708 = vsub.f32 2.0, %v707
    %v709 = vmul.f32 %v706, %v708
    %v710 = vlaneseq
    %v711 = vshrl.u32 %v710, 7
    %v712 = vsub.s32 0, %v711
    %v713 = vrot.slane %v709, %v712
    %v714 = vmul.f32 %v629, %v713
    %v715 = vmul.f32 %v631, %v713
    %v716 = vmul.f32 %v633, %v713
    %v717 = vmul.f32 %v635, %v713
    %718 = vrot.lane.b32.xlu0 %v136, 64
    %v719 = vpop.permute.xlu0 %718
    %720 = vrot.lane.b32.xlu0 %v141, 64
    %v721 = vpop.permute.xlu0 %720
    %722 = vrot.lane.b32.xlu0 %v146, 64
    %v723 = vpop.permute.xlu0 %722
    %724 = vrot.lane.b32.xlu0 %v151, 64
    %v725 = vpop.permute.xlu0 %724
    %v731 = vsel %vm24, %v714, 0
    %v734 = vsel %vm24, %v715, 0
    %v737 = vsel %vm24, %v716, 0
    %v740 = vsel %vm24, %v717, 0
    %742 = vmatprep.subr.mxu0 0.0
    %743 = vmatpush1.msra.mxu0 %v719
    %744 = vmatprep.subr.mxu0 0.0
    %745 = vmatpush1.msra.mxu0 %v721
    %746 = vmatprep.subr.mxu0 0.0
    %747 = vmatpush1.msra.mxu0 %v723
    %748 = vmatprep.subr.mxu0 0.0
    %749 = vmatpush1.msra.mxu0 %v725
    %750 = vmatprep.subr.mxu0 0.0
    %751 = vmatpush1.msra.mxu0 0.0
    %752 = vmatprep.subr.mxu0 0.0
    %753 = vmatpush1.msra.mxu0 0.0
    %754 = vmatprep.subr.mxu0 0.0
    %755 = vmatpush1.msra.mxu0 0.0
    %756 = vmatprep.subr.mxu0 0.0
    %757 = vmatpush1.msra.mxu0 0.0
    %758 = vmatprep.subr.mxu0 0.0
    %759 = vmatpush1.msra.mxu0 0.0
    %760 = vmatprep.subr.mxu0 0.0
    %761 = vmatpush1.msra.mxu0 0.0
    %762 = vmatprep.subr.mxu0 0.0
    %763 = vmatpush1.msra.mxu0 0.0
    %764 = vmatprep.subr.mxu0 0.0
    %765 = vmatpush1.msra.mxu0 0.0
    %766 = vmatprep.subr.mxu0 0.0
    %767 = vmatpush1.msra.mxu0 0.0
    %768 = vmatprep.subr.mxu0 0.0
    %769 = vmatpush1.msra.mxu0 0.0
    %770 = vmatprep.subr.mxu0 0.0
    %771 = vmatpush1.msra.mxu0 0.0
    %772 = vmatprep.subr.mxu0 0.0
    %773 = vmatpush1.msra.mxu0 0.0
    %774 = vmatprep.subr.mxu0 0.0
    %775 = vmatpush1.msra.mxu0 0.0
    %776 = vmatprep.subr.mxu0 0.0
    %777 = vmatpush1.msra.mxu0 0.0
    %778 = vmatprep.subr.mxu0 0.0
    %779 = vmatpush1.msra.mxu0 0.0
    %780 = vmatprep.subr.mxu0 0.0
    %781 = vmatpush1.msra.mxu0 0.0
    %782 = vmatprep.subr.mxu0 0.0
    %783 = vmatpush1.msra.mxu0 0.0
    %784 = vmatprep.subr.mxu0 0.0
    %785 = vmatpush1.msra.mxu0 0.0
    %786 = vmatprep.subr.mxu0 0.0
    %787 = vmatpush1.msra.mxu0 0.0
    %788 = vmatprep.subr.mxu0 0.0
    %789 = vmatpush1.msra.mxu0 0.0
    %790 = vmatprep.subr.mxu0 0.0
    %791 = vmatpush1.msra.mxu0 0.0
    %792 = vmatprep.subr.mxu0 0.0
    %793 = vmatpush1.msra.mxu0 0.0
    %794 = vmatprep.subr.mxu0 0.0
    %795 = vmatpush1.msra.mxu0 0.0
    %796 = vmatprep.subr.mxu0 0.0
    %797 = vmatpush1.msra.mxu0 0.0
    %798 = vmatprep.subr.mxu0 0.0
    %799 = vmatpush1.msra.mxu0 0.0
    %800 = vmatprep.subr.mxu0 0.0
    %801 = vmatpush1.msra.mxu0 0.0
    %802 = vmatprep.subr.mxu0 0.0
    %803 = vmatpush1.msra.mxu0 0.0
    %804 = vmatprep.subr.mxu0 0.0
    %805 = vmatpush1.msra.mxu0 0.0
    %806 = vmatprep.mubr.f32.mxu0 0.0
    %807 = vmatmul.mubr.f32.gmra.mrb[0].mxu0 %v731
    %v808 = vpop.f32.mrb[0].mxu0
    %v809 = vadd.f32 0.0, %v808
    %v810 = vpop.f32.mrb[0].mxu0
    %811 = vmatprep.mubr.f32.mxu0 0.0
    %812 = vmatmul.mubr.f32.gmra.mrb[0].mxu0 %v734
    %v813 = vpop.f32.mrb[0].mxu0
    %v814 = vadd.f32 0.0, %v813
    %v815 = vpop.f32.mrb[0].mxu0
    %816 = vmatprep.mubr.f32.mxu0 0.0
    %817 = vmatmul.mubr.f32.gmra.mrb[0].mxu0 %v737
    %v818 = vpop.f32.mrb[0].mxu0
    %v819 = vadd.f32 0.0, %v818
    %v820 = vpop.f32.mrb[0].mxu0
    %821 = vmatprep.mubr.f32.mxu0 0.0
    %822 = vmatmul.mubr.f32.gmra.mrb[0].mxu0 %v740
    %v823 = vpop.f32.mrb[0].mxu0
    %v824 = vadd.f32 0.0, %v823
    %v825 = vpop.f32.mrb[0].mxu0
    %826 = vdwg.mxu0
    %s827 = scalar_lea.vmem [#allocation2], 32
    %828 = vst.msk [vmem:[%s827] sm:$0xff] %vm24, %v809
    %829 = vst.msk [vmem:[%s827 + $0x8] sm:$0xff] %vm24, %v814
    %830 = vst.msk [vmem:[%s827 + $0x10] sm:$0xff] %vm24, %v819
    %831 = vst.msk [vmem:[%s827 + $0x18] sm:$0xff] %vm24, %v824
    // Predicated region
    $region10: #{tpu_custom_call.1} parent=1 // pred_check
      _
    $region11: #{tpu_custom_call.1} parent=1 // pred_check_branch
      %833 = sbr.rel (0) target = $region13
    $region12: #{tpu_custom_call.1} parent=1 // pred_region
      %s835 = ssub.s32 1024, 1024
      %836 = vsyncadd [#allocation3], %s835
      %s837 = sshll.u32 [#allocation2], 4
      %s838 = int_to_ptr.vmem [resolvable:$true] %s837
      %843 = dma.vmem_to_hbm [thread:$0]  %s838, 1024, %s2, [#allocation3], 128, 128, 8
    $region13: #{tpu_custom_call.1} parent=1 // pred_fallthru
      _
    // Predicated region
    $region14: #{tpu_custom_call.1} parent=1 // pred_check
      _
    $region15: #{tpu_custom_call.1} parent=1 // pred_check_branch
      %845 = sbr.rel (0) target = $region17
    $region16: #{tpu_custom_call.1} parent=1 // pred_region
      %846 = dma.done [#allocation3], 1024
    $region17: #{tpu_custom_call.1} parent=1 // pred_fallthru
      _
    %847 = vsyncpa [#allocation3], 1

</llo_original>
